<compile_context>
chip_gen: v5e
topology: v5e:2x2
jax: 0.10.0
libtpu: 0.0.40
codegen_flags: <defaults>
</compile_context>

<pallas_src>
import functools

import jax
import jax.numpy as jnp
from jax.experimental import pallas as pl
from jax.experimental.pallas import tpu as pltpu


# ---------------------------------------------------------------------------
# Kernel
# ---------------------------------------------------------------------------
def _pooling_kernel(h_ref, m_ref, w1_ref, b1_ref, w2t_ref, b2_ref, *rest,
                    s_total, with_loss):
    """Grid = (batch tiles [parallel], sequence chunks [arbitrary])."""
    if with_loss:
        y_ref, logits_ref, loss_ref, sum_acc, den_acc = rest
    else:
        y_ref = loss_ref = None
        logits_ref, sum_acc, den_acc = rest

    ks = pl.program_id(1)

    @pl.when(ks == 0)
    def _init():
        sum_acc[...] = jnp.zeros_like(sum_acc)
        den_acc[...] = jnp.zeros_like(den_acc)

    h = h_ref[...]                      # (TB, TS, H), native dtype
    m3 = m_ref[...]                     # (TB, 1, TS)
    ts_blk = h_ref.shape[1]

    if s_total % ts_blk:
        # Ragged final S-chunk: reads past the array end are undefined and
        # could contain NaNs -> zero both the mask tail and the h tail.
        base = ks * ts_blk
        vm = (jax.lax.broadcasted_iota(jnp.int32, (1, 1, ts_blk), 2) + base) < s_total
        vh = (jax.lax.broadcasted_iota(jnp.int32, (1, ts_blk, 1), 1) + base) < s_total
        m3 = jnp.where(vm, m3, jnp.zeros_like(m3))
        h = jnp.where(vh, h, jnp.zeros_like(h))

    # Masked sum over this S chunk as a batched MXU contraction: no full-tile
    # f32 temporary, f32 accumulation, VPU / load-store slots stay free for
    # the HBM stream.
    part = jnp.einsum("bqs,bsh->bqh", m3.astype(h.dtype), h,
                      preferred_element_type=jnp.float32)        # (TB, 1, H)
    sum_acc[...] += jnp.sum(part, axis=1)                        # (TB, H)
    den_acc[...] += jnp.sum(m3.astype(jnp.float32), axis=2)      # (TB, 1)

    @pl.when(ks == pl.num_programs(1) - 1)
    def _finalize():
        inv = pl.reciprocal(jnp.maximum(den_acc[...], 1e-9))     # (TB, 1)
        pooled = sum_acc[...] * inv                              # (TB, H) f32
        w1 = w1_ref[...]
        hid = jnp.tanh(jnp.dot(pooled.astype(w1.dtype), w1,
                               preferred_element_type=jnp.float32)
                       + b1_ref[...])                            # (TB, H)
        # (H,1) head as a VPU/XLU reduction; b2 is a scalar in SMEM.
        logits = (jnp.sum(hid * w2t_ref[...], axis=-1, keepdims=True)
                  + b2_ref[0, 0])                                # (TB, 1)
        logits_ref[...] = logits.astype(logits_ref.dtype)
        if with_loss:
            x = logits
            yv = y_ref[...].astype(jnp.float32)
            # BCEWithLogits, numerically stable per-example terms.
            per_ex = (jnp.maximum(x, 0.0) - x * yv
                      + jnp.log1p(jnp.exp(-jnp.abs(x))))
            loss_ref[...] = per_ex.astype(loss_ref.dtype)


# ---------------------------------------------------------------------------
# Tiling helpers
# ---------------------------------------------------------------------------
def _round_up(x, m):
    return (x + m - 1) // m * m


def _device_budgets():
    """(h-tile budget bytes per buffer, vmem_limit_bytes or None) per chip."""
    kind = ""
    try:
        kind = jax.devices()[0].device_kind.lower()
    except Exception:
        pass
    if "v7" in kind:               # 64 MiB VMEM/TC, 3.2 TB/s HBM
        return 14 << 20, 44 << 20
    if "v6" in kind:               # 128 MiB VMEM, ~1.4 TB/s HBM
        return 24 << 20, 88 << 20
    if "v5" in kind:               # 128 MiB VMEM, 16 MiB default scope
        return 12 << 20, 60 << 20
    if "v4" in kind:
        return 12 << 20, 64 << 20
    return 6 << 20, None           # unknown / older: stay within default scope


def _choose_tiles(B, S, H, itemsize, budget_bytes):
    """Pick (TB, TS) so one h tile is <= budget_bytes; returns grid sizes too."""
    pack = max(8, 32 // max(itemsize, 1))          # sublane pack: 8 f32, 16 bf16
    bytes_per_row = S * H * itemsize
    rows_fit = budget_bytes // max(bytes_per_row, 1)
    if rows_fit >= min(B, pack):
        # Full-S tiles.
        ts = S
        if B <= rows_fit:
            if B >= 2 * pack:
                # Keep >= 2 batch tiles so the "parallel" axis can shard across
                # both v7x TensorCores.
                half = _round_up(pl.cdiv(B, 2), pack)
                cap = max(pack, (rows_fit // pack) * pack)
                tb = min(half, cap)
            else:
                tb = B
        else:
            tb = max(pack, (rows_fit // pack) * pack)
    else:
        # Sequence too long even for `pack` rows: tile S as well.
        tb = pack
        ts_fit = budget_bytes // max(tb * H * itemsize, 1)
        ts = max(128, (ts_fit // 128) * 128)
        for cand in range(ts, 127, -128):          # prefer a divisor of S
            if S % cand == 0:
                ts = cand
                break
        ts = min(ts, _round_up(S, 128))
    return tb, ts, pl.cdiv(B, tb), pl.cdiv(S, ts)


# ---------------------------------------------------------------------------
# Wrapper
# ---------------------------------------------------------------------------
def pretrained_transformer_pooling_forward(last_hidden_state, masks, params,
                                           y=None, *,
                                           tile_vmem_budget_bytes=None,
                                           vmem_limit_bytes=None):
    """Pallas-backed forward of the pooling head.

    last_hidden_state: (B, S, H) float32 or bfloat16
    masks:             (B, S)    float (1.0 = real token, 0.0 = pad)
    params: dict with w1 (H,H), b1 (1,H), w2 (H,1), b2 (1,1)
            (x @ W convention: W is the transpose of torch nn.Linear.weight)
    y: optional (B,) float32 targets -> returns (logits, loss)
    """
    B, S, H = last_hidden_state.shape
    itemsize = jnp.dtype(last_hidden_state.dtype).itemsize

    def_tile, def_limit = _device_budgets()
    if tile_vmem_budget_bytes is None:
        tile_vmem_budget_bytes = def_tile
    if vmem_limit_bytes is None:
        vmem_limit_bytes = def_limit

    w1 = params["w1"]                                         # (H, H)
    b1 = params["b1"].reshape(1, H).astype(jnp.float32)       # converted once
    w2t = params["w2"].reshape(1, H).astype(jnp.float32)      # (H,1)->(1,H)
    b2 = params["b2"].reshape(1, 1).astype(jnp.float32)       # scalar in SMEM

    # Leave room for the double-buffered weight blocks + masks + scratch.
    w1_bytes = H * H * jnp.dtype(w1.dtype).itemsize
    if vmem_limit_bytes is not None:
        h_budget = max(1 << 20,
                       min(tile_vmem_budget_bytes,
                           (vmem_limit_bytes - 2 * w1_bytes - (8 << 20)) // 2))
    else:
        h_budget = tile_vmem_budget_bytes

    tb, ts, grid_b, grid_s = _choose_tiles(B, S, H, itemsize, h_budget)
    b_pad = grid_b * tb

    # Only the small per-row tensors are ever padded; the (B,S,H) activation is
    # streamed un-padded (a ragged trailing batch block produces garbage rows
    # that are discarded by the [:B] slice below).
    if b_pad != B:
        masks = jnp.pad(masks, ((0, b_pad - B), (0, 0)))
    masks3 = masks.reshape(b_pad, 1, S)   # (TB,1,TS) blocks feed the MXU directly

    h_spec = pl.BlockSpec((tb, ts, H), lambda i, k: (i, k, 0))
    m_spec = pl.BlockSpec((tb, 1, ts), lambda i, k: (i, 0, k))
    w1_spec = pl.BlockSpec((H, H), lambda i, k: (0, 0))
    b1_spec = pl.BlockSpec((1, H), lambda i, k: (0, 0))
    w2_spec = pl.BlockSpec((1, H), lambda i, k: (0, 0))
    b2_spec = pl.BlockSpec(memory_space=pltpu.MemorySpace.SMEM)
    out_spec = pl.BlockSpec((tb, 1), lambda i, k: (i, 0))
    scratch = [pltpu.VMEM((tb, H), jnp.float32),   # running masked sum
               pltpu.VMEM((tb, 1), jnp.float32)]   # running token count

    cp_kwargs = dict(dimension_semantics=("parallel", "arbitrary"))
    if vmem_limit_bytes is not None:
        cp_kwargs["vmem_limit_bytes"] = int(vmem_limit_bytes)
    cparams = pltpu.CompilerParams(**cp_kwargs)

    grid = (grid_b, grid_s)

    if y is None:
        kern = functools.partial(_pooling_kernel, s_total=S, with_loss=False)
        logits = pl.pallas_call(
            kern,
            grid=grid,
            out_shape=jax.ShapeDtypeStruct((b_pad, 1), jnp.float32),
            in_specs=[h_spec, m_spec, w1_spec, b1_spec, w2_spec, b2_spec],
            out_specs=out_spec,
            scratch_shapes=scratch,
            compiler_params=cparams,
        )(last_hidden_state, masks3, w1, b1, w2t, b2)
        return logits[:B]

    y2d = y.reshape(-1, 1).astype(jnp.float32)
    if b_pad != B:
        y2d = jnp.pad(y2d, ((0, b_pad - B), (0, 0)))
    y_spec = pl.BlockSpec((tb, 1), lambda i, k: (i, 0))

    kern = functools.partial(_pooling_kernel, s_total=S, with_loss=True)
    logits, per_ex = pl.pallas_call(
        kern,
        grid=grid,
        out_shape=(jax.ShapeDtypeStruct((b_pad, 1), jnp.float32),
                   jax.ShapeDtypeStruct((b_pad, 1), jnp.float32)),
        in_specs=[h_spec, m_spec, w1_spec, b1_spec, w2_spec, b2_spec, y_spec],
        out_specs=(out_spec, out_spec),
        scratch_shapes=scratch,
        compiler_params=cparams,
    )(last_hidden_state, masks3, w1, b1, w2t, b2, y2d)

    # Mean over the *real* batch only (padded / ragged rows excluded).
    loss = jnp.mean(per_ex[:B, 0])
    return logits[:B], loss


# ---------------------------------------------------------------------------
# Pure-JAX reference (correctness check)
# ---------------------------------------------------------------------------
def _reference_forward(h, m, params, y=None):
    me = m[:, :, None].astype(jnp.float32)
    hf = h.astype(jnp.float32)
    pooled = jnp.sum(hf * me, axis=1) / jnp.maximum(jnp.sum(me, axis=1), 1e-9)
    hid = jnp.tanh(pooled @ params["w1"] + params["b1"])
    logits = hid @ params["w2"] + params["b2"]
    if y is None:
        return logits
    x = logits[:, 0]
    loss = jnp.mean(jnp.maximum(x, 0.0) - x * y +
                    jnp.log1p(jnp.exp(-jnp.abs(x))))
    return logits, loss


if __name__ == "__main__":
    # --- small config consistent with the module's forward: batch=2, seq=8,
    #     hidden=32 (single tile, exercises both the logits and loss paths).
    B, S, H = 2, 8, 32
    key = jax.random.PRNGKey(0)
    k_h, k_w1, k_b1, k_w2, k_b2, k_y = jax.random.split(key, 6)

    last_hidden_state = jax.random.normal(k_h, (B, S, H), dtype=jnp.float32)
    masks = jnp.array([[1.0] * S,
                       [1.0] * (S - 3) + [0.0] * 3], dtype=jnp.float32)
    params = {
        "w1": jax.random.normal(k_w1, (H, H), dtype=jnp.float32) * 0.05,
        "b1": jax.random.normal(k_b1, (1, H), dtype=jnp.float32) * 0.05,
        "w2": jax.random.normal(k_w2, (H, 1), dtype=jnp.float32) * 0.05,
        "b2": jax.random.normal(k_b2, (1, 1), dtype=jnp.float32) * 0.05,
    }
    y = (jax.random.uniform(k_y, (B,)) > 0.5).astype(jnp.float32)

    logits = pretrained_transformer_pooling_forward(last_hidden_state, masks,
                                                    params)
    logits = jax.block_until_ready(logits)
    logits2, loss = pretrained_transformer_pooling_forward(
        last_hidden_state, masks, params, y=y)
    loss = jax.block_until_ready(loss)

    ref_logits = _reference_forward(last_hidden_state, masks, params)
    ref_logits2, ref_loss = _reference_forward(last_hidden_state, masks,
                                               params, y=y)
    # The MXU pooling contraction vs. the reference's VPU sum can differ at the
    # ~1e-4 level under TPU default matmul precision -> 1e-3 tolerance.
    assert logits.shape == (B, 1)
    assert jnp.allclose(logits, ref_logits, atol=1e-3, rtol=1e-3), "logits mismatch"
    assert jnp.allclose(logits2, ref_logits2, atol=1e-3, rtol=1e-3), "logits(+y) mismatch"
    assert jnp.allclose(loss, ref_loss, atol=1e-3, rtol=1e-3), "loss mismatch"

    # --- second config exercising the tiled path: 2 batch tiles x 2 sequence
    #     chunks with the scratch accumulator (budget forced small).
    B2, S2, H2 = 16, 256, 128
    ks2 = jax.random.split(jax.random.PRNGKey(1), 6)
    h2 = jax.random.normal(ks2[0], (B2, S2, H2), dtype=jnp.float32)
    lens = (jnp.arange(B2) * 37) % S2 + 1
    m2 = (jnp.arange(S2)[None, :] < lens[:, None]).astype(jnp.float32)
    params2 = {
        "w1": jax.random.normal(ks2[1], (H2, H2), dtype=jnp.float32) * 0.05,
        "b1": jax.random.normal(ks2[2], (1, H2), dtype=jnp.float32) * 0.05,
        "w2": jax.random.normal(ks2[3], (H2, 1), dtype=jnp.float32) * 0.05,
        "b2": jax.random.normal(ks2[4], (1, 1), dtype=jnp.float32) * 0.05,
    }
    y2 = (jax.random.uniform(ks2[5], (B2,)) > 0.5).astype(jnp.float32)
    logits3, loss3 = pretrained_transformer_pooling_forward(
        h2, m2, params2, y=y2,
        tile_vmem_budget_bytes=8 * 128 * H2 * 4)   # -> tb=8, ts=128, grid (2,2)
    logits3 = jax.block_until_ready(logits3)
    ref_logits3, ref_loss3 = _reference_forward(h2, m2, params2, y=y2)
    assert jnp.allclose(logits3, ref_logits3, atol=1e-3, rtol=1e-3), "tiled logits mismatch"
    assert jnp.allclose(loss3, ref_loss3, atol=1e-3, rtol=1e-3), "tiled loss mismatch"

    print("KERNEL_OK")
</pallas_src>

<mosaic_0001>
module attributes {stable_mosaic.version = 11 : i64} {
  func.func @_pooling_kernel(%arg0: i32, %arg1: i32, %arg2: memref<2x8x32xf32, #tpu.memory_space<vmem>>, %arg3: memref<2x1x8xf32, #tpu.memory_space<vmem>>, %arg4: memref<32x32xf32, #tpu.memory_space<vmem>>, %arg5: memref<1x32xf32, #tpu.memory_space<vmem>>, %arg6: memref<1x32xf32, #tpu.memory_space<vmem>>, %arg7: memref<1x1xf32, #tpu.memory_space<smem>>, %arg8: memref<2x1xf32, #tpu.memory_space<vmem>>, %arg9: memref<2x32xf32, #tpu.memory_space<vmem>>, %arg10: memref<2x1xf32, #tpu.memory_space<vmem>>) attributes {dimension_semantics = [#tpu.dimension_semantics<parallel>, #tpu.dimension_semantics<arbitrary>], iteration_bounds = array<i64: 1, 1>, scalar_prefetch = 0 : i64, scratch_operands = 2 : i64, tpu.core_type = #tpu.core_type<tc>, window_params = [{transform_indices = @transform_0, window_bounds = array<i64: 2, 8, 32>}, {transform_indices = @transform_1, window_bounds = array<i64: 2, 1, 8>}, {pipeline_mode = #tpu.pipeline_mode<synchronous>, transform_indices = @transform_2, window_bounds = array<i64: 32, 32>}, {pipeline_mode = #tpu.pipeline_mode<synchronous>, transform_indices = @transform_3, window_bounds = array<i64: 1, 32>}, {pipeline_mode = #tpu.pipeline_mode<synchronous>, transform_indices = @transform_4, window_bounds = array<i64: 1, 32>}, {transform_indices = @transform_5, window_bounds = array<i64: 1, 1>}, {transform_indices = @transform_6, window_bounds = array<i64: 2, 1>}]} {
    %c0_i32 = arith.constant 0 : i32
    %0 = arith.cmpi eq, %arg1, %c0_i32 : i32
    %1 = arith.extui %0 : i1 to i32
    %c0_i32_0 = arith.constant 0 : i32
    %2 = arith.cmpi ne, %1, %c0_i32_0 : i32
    scf.if %2 {
      %cst_18 = arith.constant 0.000000e+00 : f32
      %17 = vector.broadcast %cst_18 : f32 to vector<2x32xf32>
      %c0_19 = arith.constant 0 : index
      %c0_20 = arith.constant 0 : index
      %18 = vector.load %arg9[%c0_19, %c0_20] : memref<2x32xf32, #tpu.memory_space<vmem>>, vector<2x32xf32>
      tpu.vector_store %arg9[%c0_19, %c0_20], %17 {strides = array<i32>} : memref<2x32xf32, #tpu.memory_space<vmem>>, vector<2x32xf32>,
      %cst_21 = arith.constant 0.000000e+00 : f32
      %19 = vector.broadcast %cst_21 : f32 to vector<2x1xf32>
      %c0_22 = arith.constant 0 : index
      %c0_23 = arith.constant 0 : index
      %20 = vector.load %arg10[%c0_22, %c0_23] : memref<2x1xf32, #tpu.memory_space<vmem>>, vector<2x1xf32>
      tpu.vector_store %arg10[%c0_22, %c0_23], %19 {strides = array<i32>} : memref<2x1xf32, #tpu.memory_space<vmem>>, vector<2x1xf32>,
    } else {
    }
    %c0 = arith.constant 0 : index
    %c0_1 = arith.constant 0 : index
    %c0_2 = arith.constant 0 : index
    %3 = vector.load %arg2[%c0, %c0_1, %c0_2] : memref<2x8x32xf32, #tpu.memory_space<vmem>>, vector<2x8x32xf32>
    %c0_3 = arith.constant 0 : index
    %c0_4 = arith.constant 0 : index
    %c0_5 = arith.constant 0 : index
    %4 = vector.load %arg3[%c0_3, %c0_4, %c0_5] : memref<2x1x8xf32, #tpu.memory_space<vmem>>, vector<2x1x8xf32>
    "tpu.trace_start"() <{level = 10 : i32, message = "bqs,bsh->bqh"}> : () -> ()
    %cst = arith.constant dense<0.000000e+00> : vector<2x1x32xf32>
    %5 = tpu.matmul %4, %3, %cst {dimension_numbers = #tpu.dot_dimension_numbers<[2], [1], [1], [2], [0, 0, 0, 1, 1, 2], [0], [0]>} : vector<2x1x8xf32>, vector<2x8x32xf32>, vector<2x1x32xf32> -> vector<2x1x32xf32>
    "tpu.trace_stop"() : () -> ()
    %c0_6 = arith.constant 0 : index
    %c0_7 = arith.constant 0 : index
    %6 = vector.load %arg9[%c0_6, %c0_7] : memref<2x32xf32, #tpu.memory_space<vmem>>, vector<2x32xf32>
    %cst_8 = arith.constant dense<0.000000e+00> : vector<2x32xf32>
    %7 = vector.multi_reduction <add>, %5, %cst_8 [1] : vector<2x1x32xf32> to vector<2x32xf32>
    %8 = arith.addf %6, %7 : vector<2x32xf32>
    %c0_9 = arith.constant 0 : index
    %c0_10 = arith.constant 0 : index
    %9 = vector.load %arg9[%c0_9, %c0_10] : memref<2x32xf32, #tpu.memory_space<vmem>>, vector<2x32xf32>
    tpu.vector_store %arg9[%c0_9, %c0_10], %8 {strides = array<i32>} : memref<2x32xf32, #tpu.memory_space<vmem>>, vector<2x32xf32>,
    %c0_11 = arith.constant 0 : index
    %c0_12 = arith.constant 0 : index
    %10 = vector.load %arg10[%c0_11, %c0_12] : memref<2x1xf32, #tpu.memory_space<vmem>>, vector<2x1xf32>
    %cst_13 = arith.constant dense<0.000000e+00> : vector<2x1xf32>
    %11 = vector.multi_reduction <add>, %4, %cst_13 [2] : vector<2x1x8xf32> to vector<2x1xf32>
    %12 = arith.addf %10, %11 : vector<2x1xf32>
    %c0_14 = arith.constant 0 : index
    %c0_15 = arith.constant 0 : index
    %13 = vector.load %arg10[%c0_14, %c0_15] : memref<2x1xf32, #tpu.memory_space<vmem>>, vector<2x1xf32>
    tpu.vector_store %arg10[%c0_14, %c0_15], %12 {strides = array<i32>} : memref<2x1xf32, #tpu.memory_space<vmem>>, vector<2x1xf32>,
    %c0_i32_16 = arith.constant 0 : i32
    %14 = arith.cmpi eq, %arg1, %c0_i32_16 : i32
    %15 = arith.extui %14 : i1 to i32
    %c0_i32_17 = arith.constant 0 : i32
    %16 = arith.cmpi ne, %15, %c0_i32_17 : i32
    scf.if %16 {
      %c0_18 = arith.constant 0 : index
      %c0_19 = arith.constant 0 : index
      %17 = vector.load %arg10[%c0_18, %c0_19] : memref<2x1xf32, #tpu.memory_space<vmem>>, vector<2x1xf32>
      %cst_20 = arith.constant 9.99999971E-10 : f32
      %18 = vector.broadcast %cst_20 : f32 to vector<2x1xf32>
      %19 = arith.maximumf %17, %18 : vector<2x1xf32>
      %20 = tpu.reciprocal %19 : vector<2x1xf32> -> vector<2x1xf32>
      %c0_21 = arith.constant 0 : index
      %c0_22 = arith.constant 0 : index
      %21 = vector.load %arg9[%c0_21, %c0_22] : memref<2x32xf32, #tpu.memory_space<vmem>>, vector<2x32xf32>
      %22 = vector.broadcast %20 : vector<2x1xf32> to vector<2x32xf32>
      %23 = arith.mulf %21, %22 : vector<2x32xf32>
      %c0_23 = arith.constant 0 : index
      %c0_24 = arith.constant 0 : index
      %24 = vector.load %arg4[%c0_23, %c0_24] : memref<32x32xf32, #tpu.memory_space<vmem>>, vector<32x32xf32>
      %cst_25 = arith.constant dense<0.000000e+00> : vector<2x32xf32>
      %25 = tpu.matmul %23, %24, %cst_25 {dimension_numbers = #tpu.dot_dimension_numbers<[1], [0], [0], [1], [0, 0, 1, 1], [], []>} : vector<2x32xf32>, vector<32x32xf32>, vector<2x32xf32> -> vector<2x32xf32>
      %c0_26 = arith.constant 0 : index
      %c0_27 = arith.constant 0 : index
      %26 = vector.load %arg5[%c0_26, %c0_27] : memref<1x32xf32, #tpu.memory_space<vmem>>, vector<1x32xf32>
      %27 = vector.broadcast %26 : vector<1x32xf32> to vector<2x32xf32>
      %28 = arith.addf %25, %27 : vector<2x32xf32>
      %29 = math.tanh %28 : vector<2x32xf32>
      %c0_28 = arith.constant 0 : index
      %c0_29 = arith.constant 0 : index
      %30 = vector.load %arg6[%c0_28, %c0_29] : memref<1x32xf32, #tpu.memory_space<vmem>>, vector<1x32xf32>
      %31 = vector.broadcast %30 : vector<1x32xf32> to vector<2x32xf32>
      %32 = arith.mulf %29, %31 : vector<2x32xf32>
      %cst_30 = arith.constant dense<0.000000e+00> : vector<2xf32>
      %33 = vector.multi_reduction <add>, %32, %cst_30 [1] : vector<2x32xf32> to vector<2xf32>
      %34 = vector.shape_cast %33 : vector<2xf32> to vector<2x1xf32>
      %c0_31 = arith.constant 0 : index
      %c0_32 = arith.constant 0 : index
      %35 = memref.load %arg7[%c0_31, %c0_32] : memref<1x1xf32, #tpu.memory_space<smem>>
      %36 = vector.broadcast %35 : f32 to vector<2x1xf32>
      %37 = arith.addf %34, %36 : vector<2x1xf32>
      %c0_33 = arith.constant 0 : index
      %c0_34 = arith.constant 0 : index
      %38 = vector.load %arg8[%c0_33, %c0_34] : memref<2x1xf32, #tpu.memory_space<vmem>>, vector<2x1xf32>
      tpu.vector_store %arg8[%c0_33, %c0_34], %37 {strides = array<i32>} : memref<2x1xf32, #tpu.memory_space<vmem>>, vector<2x1xf32>,
    } else {
    }
    return
  }
  func.func @transform_0(%arg0: i32, %arg1: i32) -> (i32, i32, i32) {
    %c0_i32 = arith.constant 0 : i32
    %c0_i32_0 = arith.constant 0 : i32
    return %arg0, %arg1, %c0_i32 : i32, i32, i32
  }
  func.func @transform_1(%arg0: i32, %arg1: i32) -> (i32, i32, i32) {
    %c0_i32 = arith.constant 0 : i32
    %c0_i32_0 = arith.constant 0 : i32
    return %arg0, %c0_i32, %arg1 : i32, i32, i32
  }
  func.func @transform_2(%arg0: i32, %arg1: i32) -> (i32, i32) {
    %c0_i32 = arith.constant 0 : i32
    %c0_i32_0 = arith.constant 0 : i32
    %c0_i32_1 = arith.constant 0 : i32
    return %c0_i32, %c0_i32_0 : i32, i32
  }
  func.func @transform_3(%arg0: i32, %arg1: i32) -> (i32, i32) {
    %c0_i32 = arith.constant 0 : i32
    %c0_i32_0 = arith.constant 0 : i32
    %c0_i32_1 = arith.constant 0 : i32
    return %c0_i32, %c0_i32_0 : i32, i32
  }
  func.func @transform_4(%arg0: i32, %arg1: i32) -> (i32, i32) {
    %c0_i32 = arith.constant 0 : i32
    %c0_i32_0 = arith.constant 0 : i32
    %c0_i32_1 = arith.constant 0 : i32
    return %c0_i32, %c0_i32_0 : i32, i32
  }
  func.func @transform_5(%arg0: i32, %arg1: i32) -> (i32, i32) {
    %c0_i32 = arith.constant 0 : i32
    %c0_i32_0 = arith.constant 0 : i32
    %c0_i32_1 = arith.constant 0 : i32
    return %c0_i32, %c0_i32_0 : i32, i32
  }
  func.func @transform_6(%arg0: i32, %arg1: i32) -> (i32, i32) {
    %c0_i32 = arith.constant 0 : i32
    %c0_i32_0 = arith.constant 0 : i32
    return %arg0, %c0_i32 : i32, i32
  }
}

</mosaic_0001>

<llo_original>
// kernel: tpu_custom_call.1
$region0: #{tpu_custom_call.1}
  #allocation0 [shape = 'u32[]', space=smem, size = 0x4, offset = 0x4, fixed_abs, tag = 'smem constant byte address 0x4 - core index']
  #allocation1 [shape = 'u32[72,128]{1,0:T(1,128)}', space=vmem, size = 0x9000, scoped, tag = 'internal scratch']
  #allocation2 [shape = 'f32[2,32]{1,0:T(2,128)}', space=vmem, size = 0x400, scoped, tag = 'scratch operand']
  #allocation3 [shape = 'f32[2,1]{1,0:T(2,128)}', space=vmem, size = 0x400, scoped, tag = 'scratch operand']
  #allocation4 [shape = 'f32[1,1]{1,0:T(1,128)S(6)}', space=smem, size = 0x200, scoped, tag = 'scoped memory for tpu_custom_call.1']
  %s0 = inlined_call_operand.hbm [shape: f32[2,8,32], index: 0, kind: input, shape index: {}]
  %s1 = inlined_call_operand.vmem [shape: f32[2,1,8], index: 1, kind: input, shape index: {}]
  %s2 = inlined_call_operand.hbm [shape: f32[32,32], index: 2, kind: input, shape index: {}]
  %s3 = inlined_call_operand.vmem [shape: f32[1,32], index: 3, kind: input, shape index: {}]
  %s4 = inlined_call_operand.vmem [shape: f32[1,32], index: 4, kind: input, shape index: {}]
  %s5 = inlined_call_operand.<no memory space> [shape: f32[1,1], index: 5, kind: input, shape index: {}]
  %s6 = inlined_call_operand.vmem [shape: f32[2,1], index: 6, kind: output, shape index: {}]
  %s7 = sld [smem:[#allocation0]]
  $region50: #{tpu_custom_call.1} parent=0
    _
  %s9 = ssub.s32 1, %s7
  %s10 = scalar_select 0, %s9, %s7
  %11 = sst [smem:[#allocation4]] %s5
  $region1: #{tpu_custom_call.1} parent=0
    #allocation5 [shape = 'u8[8192]{0}', space=vmem, size = 0x2000, scoped, tag = 'input window, operand 0, single buffered']
    #allocation6 [shape = 's32[1]{0}', space=sflag, size = 0x4, scoped, tag = 'scoped memory for tpu_custom_call.1']
    #allocation7 [shape = 'u8[16384]{0}', space=vmem, size = 0x4000, scoped, tag = 'input window, operand 2, single buffered']
    #allocation8 [shape = 's32[1]{0}', space=sflag, size = 0x4, scoped, tag = 'scoped memory for tpu_custom_call.1']
    %12 = vsyncpa [#allocation6], 0
    %13 = vsyncpa [#allocation8], 0
    // Predicated region
    $region2: #{tpu_custom_call.1} parent=1 // pred_check
      _
    $region3: #{tpu_custom_call.1} parent=1 // pred_check_branch
      %15 = sbr.rel (0) target = $region5
    $region4: #{tpu_custom_call.1} parent=1 // pred_region
      %17 = vsyncadd [#allocation6], 0
      %s18 = sshll.u32 %s0, 4
      %s19 = int_to_ptr.hbm [resolvable:$true] %s18
      %s20 = sshll.u32 [#allocation5], 4
      %s21 = int_to_ptr.vmem [resolvable:$true] %s20
      %26 = dma.hbm_to_vmem [thread:$0]  %s19, 256, %s21, [#allocation6], 128, 128, 8
    $region5: #{tpu_custom_call.1} parent=1 // pred_fallthru
      _
    // Predicated region
    $region6: #{tpu_custom_call.1} parent=1 // pred_check
      _
    $region7: #{tpu_custom_call.1} parent=1 // pred_check_branch
      %28 = sbr.rel (0) target = $region9
    $region8: #{tpu_custom_call.1} parent=1 // pred_region
      _
    $region9: #{tpu_custom_call.1} parent=1 // pred_fallthru
      _
    // Predicated region
    $region10: #{tpu_custom_call.1} parent=1 // pred_check
      _
    $region11: #{tpu_custom_call.1} parent=1 // pred_check_branch
      %30 = sbr.rel (0) target = $region13
    $region12: #{tpu_custom_call.1} parent=1 // pred_region
      %32 = vsyncadd [#allocation8], 0
      %s33 = sshll.u32 %s2, 4
      %s34 = int_to_ptr.hbm [resolvable:$true] %s33
      %s35 = sshll.u32 [#allocation7], 4
      %s36 = int_to_ptr.vmem [resolvable:$true] %s35
      %41 = dma.hbm_to_vmem [thread:$0]  %s34, 512, %s36, [#allocation8], 128, 128, 8
    $region13: #{tpu_custom_call.1} parent=1 // pred_fallthru
      _
    // Predicated region
    $region14: #{tpu_custom_call.1} parent=1 // pred_check
      _
    $region15: #{tpu_custom_call.1} parent=1 // pred_check_branch
      %43 = sbr.rel (0) target = $region17
    $region16: #{tpu_custom_call.1} parent=1 // pred_region
      _
    $region17: #{tpu_custom_call.1} parent=1 // pred_fallthru
      _
    // Predicated region
    $region18: #{tpu_custom_call.1} parent=1 // pred_check
      _
    $region19: #{tpu_custom_call.1} parent=1 // pred_check_branch
      %45 = sbr.rel (0) target = $region21
    $region20: #{tpu_custom_call.1} parent=1 // pred_region
      _
    $region21: #{tpu_custom_call.1} parent=1 // pred_fallthru
      _
    // Predicated region
    $region22: #{tpu_custom_call.1} parent=1 // pred_check
      _
    $region23: #{tpu_custom_call.1} parent=1 // pred_check_branch
      %47 = sbr.rel (0) target = $region25
    $region24: #{tpu_custom_call.1} parent=1 // pred_region
      _
    $region25: #{tpu_custom_call.1} parent=1 // pred_fallthru
      _
    // Predicated region
    $region26: #{tpu_custom_call.1} parent=1 // pred_check
      _
    $region27: #{tpu_custom_call.1} parent=1 // pred_check_branch
      %49 = sbr.rel (0) target = $region29
    $region28: #{tpu_custom_call.1} parent=1 // pred_region
      %51 = dma.done [#allocation6], 256
    $region29: #{tpu_custom_call.1} parent=1 // pred_fallthru
      _
    // Predicated region
    $region30: #{tpu_custom_call.1} parent=1 // pred_check
      _
    $region31: #{tpu_custom_call.1} parent=1 // pred_check_branch
      %53 = sbr.rel (0) target = $region33
    $region32: #{tpu_custom_call.1} parent=1 // pred_region
      %55 = dma.done [#allocation8], 512
    $region33: #{tpu_custom_call.1} parent=1 // pred_fallthru
      _
    %p56 = scmp.eq.s32.totalorder 0, 0
    // Predicated region
    $region34: #{tpu_custom_call.1} parent=1 // pred_check
      %p57 = pneg %p56
    $region35: #{tpu_custom_call.1} parent=1 // pred_check_branch
      %59 = sbr.rel (%p57) target = $region37
    $region36: #{tpu_custom_call.1} parent=1 // pred_region
      %vm60 = vcmask 254976
      %61 = vst.msk [vmem:[#allocation2] sm:$0x3] %vm60, 0.0
      %vm62 = vcmask 1024
      %63 = vst.msk [vmem:[#allocation3] sm:$0x3] %vm62, 0.0
    $region37: #{tpu_custom_call.1} parent=1 // pred_fallthru
      _
    %v64 = vld [vmem:[#allocation5] sm:$0xff]
    %v65 = vld [vmem:[#allocation5 + $0x8] sm:$0xff]
    %v66 = vld [vmem:[%s1] sm:$0x1]
    %v67 = vld [vmem:[%s1 + $0x1] sm:$0x1]
    %vm68 = vcmask 64512
    %v70 = vsel %vm68, %v66, 0
    %72 = vmatpush.msra.mxu0 0.0
    %73 = vmatpush.msra.mxu0 0.0
    %74 = vmatpush.msra.mxu0 0.0
    %75 = vmatpush.msra.mxu0 0.0
    %76 = vmatpush.msra.mxu0 0.0
    %77 = vmatpush.msra.mxu0 0.0
    %78 = vmatpush.msra.mxu0 0.0
    %79 = vmatpush.msra.mxu0 0.0
    %80 = vmatpush.msra.mxu0 0.0
    %81 = vmatpush.msra.mxu0 0.0
    %82 = vmatpush.msra.mxu0 0.0
    %83 = vmatpush.msra.mxu0 0.0
    %84 = vmatpush.msra.mxu0 0.0
    %85 = vmatpush.msra.mxu0 0.0
    %86 = vmatpush.msra.mxu0 0.0
    %87 = vmatpush.msra.mxu0 %v64
    %88 = vmatmul.f32.gmra.mxu0 %v70
    %v89 = vpop.f32.mrf.mxu0
    %v90 = vadd.f32 0.0, %v89
    %91 = vdwg.mxu0
    %v93 = vsel %vm68, %v67, 0
    %95 = vmatpush.msra.mxu0 0.0
    %96 = vmatpush.msra.mxu0 0.0
    %97 = vmatpush.msra.mxu0 0.0
    %98 = vmatpush.msra.mxu0 0.0
    %99 = vmatpush.msra.mxu0 0.0
    %100 = vmatpush.msra.mxu0 0.0
    %101 = vmatpush.msra.mxu0 0.0
    %102 = vmatpush.msra.mxu0 0.0
    %103 = vmatpush.msra.mxu0 0.0
    %104 = vmatpush.msra.mxu0 0.0
    %105 = vmatpush.msra.mxu0 0.0
    %106 = vmatpush.msra.mxu0 0.0
    %107 = vmatpush.msra.mxu0 0.0
    %108 = vmatpush.msra.mxu0 0.0
    %109 = vmatpush.msra.mxu0 0.0
    %110 = vmatpush.msra.mxu0 %v65
    %111 = vmatmul.f32.gmra.mxu0 %v93
    %v112 = vpop.f32.mrf.mxu0
    %v113 = vadd.f32 0.0, %v112
    %114 = vdwg.mxu0
    %v115 = vld [vmem:[#allocation2] sm:$0x3]
    %v116 = vadd.f32 %v90, 0.0
    %v117 = vadd.f32 %v113, 0.0
    %v120 = vrot.slane %v117, 7
    %vm121 = vcmask 1041409
    %v122 = vsel %vm121, %v120, %v116
    %v124 = vadd.f32 %v115, %v122
    %vm125 = vcmask 254976
    %126 = vst.msk [vmem:[#allocation2] sm:$0x3] %vm125, %v124
    %v127 = vld [vmem:[#allocation3] sm:$0x3]
    %vm128 = vcmask 57344
    %v129 = vsel %vm128, %v66, 0.0
    %130 = vadd.xlane.f32.xlu0 %v129
    %v131 = vpop.xlane.xlu0 %130
    %v132 = vsel %vm128, %v67, 0.0
    %133 = vadd.xlane.f32.xlu0 %v132
    %v134 = vpop.xlane.xlu0 %133
    %v137 = vrot.slane %v134, 7
    %v138 = vsel %vm121, %v137, %v131
    %v140 = vadd.f32 %v127, %v138
    %vm141 = vcmask 1024
    %142 = vst.msk [vmem:[#allocation3] sm:$0x3] %vm141, %v140
    // Predicated region
    $region38: #{tpu_custom_call.1} parent=1 // pred_check
      %p143 = pneg %p56
    $region39: #{tpu_custom_call.1} parent=1 // pred_check_branch
      %145 = sbr.rel (%p143) target = $region41
    $region40: #{tpu_custom_call.1} parent=1 // pred_region
      %v146 = vld [vmem:[#allocation3] sm:$0x3]
      %v147 = vmax.f32 %v146, 1e-09
      %v148 = vrcp.pop %v147
      %v149 = vmul.f32 %v147, %v148
      %v150 = vsub.f32 1.0, %v149
      %v151 = vmul.f32 %v148, %v150
      %v152 = vadd.f32 %v148, %v151
      %vm153 = vweird.f32 %v147
      %vm154 = vweird.f32 %v148
      %vm155 = vmor %vm153, %vm154
      %v156 = vsel %vm155, %v148, %v152
      %v157 = vand.u32 2147483647, %v147
      %vm158 = vcmp.eq.f32.partialorder %v157, 8.507059e+37
      %v159 = vand.u32 %v147, 2147483648
      %v160 = vor.u32 1.1754944e-38, %v159
      %v161 = vsel %vm158, %v160, %v156
      %v162 = vld [vmem:[#allocation2] sm:$0x3]
      %164 = vset.pattern.permute.xlu0 0
      %165 = vperm.xlu0 %164, %v161
      %v166 = vpop.permute.xlu0 %165
      %v168 = vmul.f32 %v162, %v166
      %v169 = vld [vmem:[#allocation7] sm:$0xff]
      %v170 = vld [vmem:[#allocation7 + $0x8] sm:$0xff]
      %v171 = vld [vmem:[#allocation7 + $0x10] sm:$0xff]
      %v172 = vld [vmem:[#allocation7 + $0x18] sm:$0xff]
      %v173 = vld [vmem:[%s3] sm:$0x1]
      %v175 = vperm.slane %v173, 0
      %vm177 = vcmask 261120
      %v179 = vsel %vm177, %v168, 0
      %181 = vmatpush.msra.mxu0 0.0
      %182 = vmatpush.msra.mxu0 0.0
      %183 = vmatpush.msra.mxu0 0.0
      %184 = vmatpush.msra.mxu0 0.0
      %185 = vmatpush.msra.mxu0 0.0
      %186 = vmatpush.msra.mxu0 0.0
      %187 = vmatpush.msra.mxu0 0.0
      %188 = vmatpush.msra.mxu0 0.0
      %189 = vmatpush.msra.mxu0 0.0
      %190 = vmatpush.msra.mxu0 0.0
      %191 = vmatpush.msra.mxu0 0.0
      %192 = vmatpush.msra.mxu0 0.0
      %193 = vmatpush.msra.mxu0 %v172
      %194 = vmatpush.msra.mxu0 %v171
      %195 = vmatpush.msra.mxu0 %v170
      %196 = vmatpush.msra.mxu0 %v169
      %197 = vmatmul.f32.gmra.mxu0 %v179
      %v198 = vpop.f32.mrf.mxu0
      %v199 = vadd.f32 %v175, %v198
      %200 = vdwg.mxu0
      %v201 = vtanh.pop %v199
      %v202 = vld [vmem:[%s4] sm:$0x1]
      %v204 = vperm.slane %v202, 0
      %v206 = vmul.f32 %v201, %v204
      %v207 = vsel %vm125, %v206, 0.0
      %208 = vadd.xlane.f32.xlu0 %v207
      %v209 = vpop.xlane.xlu0 %208
      %s210 = sld [smem:[#allocation4]]
      %v211 = vstv %s210
      %v212 = vadd.f32 %v209, %v211
      %213 = vst.msk [vmem:[%s6] sm:$0x3] %vm141, %v212
    $region41: #{tpu_custom_call.1} parent=1 // pred_fallthru
      _
    // Predicated region
    $region42: #{tpu_custom_call.1} parent=1 // pred_check
      _
    $region43: #{tpu_custom_call.1} parent=1 // pred_check_branch
      %215 = sbr.rel (0) target = $region45
    $region44: #{tpu_custom_call.1} parent=1 // pred_region
      _
    $region45: #{tpu_custom_call.1} parent=1 // pred_fallthru
      _
    // Predicated region
    $region46: #{tpu_custom_call.1} parent=1 // pred_check
      _
    $region47: #{tpu_custom_call.1} parent=1 // pred_check_branch
      %217 = sbr.rel (0) target = $region49
    $region48: #{tpu_custom_call.1} parent=1 // pred_region
      _
    $region49: #{tpu_custom_call.1} parent=1 // pred_fallthru
      _
    %218 = vsyncpa [#allocation6], 1
    %219 = vsyncpa [#allocation8], 1

</llo_original>
